<compile_context>
chip_gen: v5e
topology: v5e:2x2
jax: 0.10.0
libtpu: 0.0.40
codegen_flags: <defaults>
</compile_context>

<pallas_src>
import functools

import jax
import jax.numpy as jnp
from jax.experimental import pallas as pl
from jax.experimental.pallas import tpu as pltpu


def _round_up(x: int, m: int) -> int:
    return (x + m - 1) // m * m


def _encode_kernel(x_ref, w_ref, b_ref, o_ref, *, compute_dtype):
    # x_ref: [TILE_N, h_emb] (input dtype)   w_ref: [h_emb, h_enc] (param dtype)
    # b_ref: [1, h_enc] (f32)                o_ref: [TILE_N, h_enc]
    # Cast to the MXU compute dtype in-kernel (hidden under the DMA shadow;
    # avoids a separate wrapper-side cast pass over x in HBM).
    x = x_ref[...].astype(compute_dtype)
    w = w_ref[...].astype(compute_dtype)
    acc = jnp.dot(x, w, preferred_element_type=jnp.float32)
    # Bias add in f32, single cast on store.
    o_ref[...] = (acc + b_ref[...]).astype(o_ref.dtype)


def iencoder_forward(x, w, b, *, tile_n: int = 2048,
                     compute_dtype=jnp.bfloat16, out_dtype=None):
    """Per-node linear encode: [N, h_emb] -> [N, h_enc]."""
    n, h_emb = x.shape
    h_emb_w, h_enc = w.shape
    assert h_emb == h_emb_w
    assert b.shape == (h_enc,)

    out_dtype = x.dtype if out_dtype is None else jnp.dtype(out_dtype)

    # Node tile: multiple of 8 sublanes; never (much) larger than N.
    tile_n = max(8, min(_round_up(tile_n, 8), _round_up(n, 8)))

    # VMEM guard (matters once h_enc / tile_n grow, esp. v7x's 64 MiB VMEM):
    # double-buffered x + out tiles plus resident W / b must fit comfortably.
    def _tile_bytes(t):
        x_b = t * h_emb * x.dtype.itemsize
        o_b = t * h_enc * out_dtype.itemsize
        w_b = h_emb * h_enc * w.dtype.itemsize
        b_b = h_enc * 4
        return 2 * (x_b + o_b) + 2 * (w_b + b_b)

    vmem_budget = 24 * 1024 * 1024  # leave headroom under the scoped default
    while tile_n > 8 and _tile_bytes(tile_n) > vmem_budget:
        tile_n = max(8, _round_up(tile_n // 2, 8))

    grid = (pl.cdiv(n, tile_n),)  # ragged tail handled as a partial block

    b2 = b.astype(jnp.float32).reshape(1, h_enc)

    # Honest (unpadded) streams so XLA keeps overlapping neighboring ops.
    cost = pl.CostEstimate(
        flops=2 * n * h_emb * h_enc,
        transcendentals=0,
        bytes_accessed=(x.size * x.dtype.itemsize
                        + w.size * w.dtype.itemsize
                        + b2.size * b2.dtype.itemsize
                        + n * h_enc * out_dtype.itemsize),
    )

    kernel = functools.partial(_encode_kernel, compute_dtype=compute_dtype)

    return pl.pallas_call(
        kernel,
        out_shape=jax.ShapeDtypeStruct((n, h_enc), out_dtype),
        grid_spec=pltpu.PrefetchScalarGridSpec(
            num_scalar_prefetch=0,
            grid=grid,
            in_specs=[
                # x: streamed over node tiles (default double-buffering;
                # bump to pipeline_mode=pl.Buffered(3) only if a profile
                # shows exposed input DMA).
                pl.BlockSpec((tile_n, h_emb), lambda i: (i, 0)),
                # W, b: resident in VMEM across all node tiles.
                pl.BlockSpec((h_emb, h_enc), lambda i: (0, 0)),
                pl.BlockSpec((1, h_enc), lambda i: (0, 0)),
            ],
            out_specs=pl.BlockSpec((tile_n, h_enc), lambda i: (i, 0)),
        ),
        compiler_params=pltpu.CompilerParams(
            dimension_semantics=("parallel",),
        ),
        cost_estimate=cost,
    )(x, w, b2)


if __name__ == "__main__":
    # Small shapes consistent with the module interface.
    h_emb, h_enc = 32, 32
    n_nodes = 16  # total nodes in the "batched graph"

    key = jax.random.PRNGKey(0)
    kx, kw, kb = jax.random.split(key, 3)

    x = jax.random.normal(kx, (n_nodes, h_emb), dtype=jnp.float32)
    # Deterministic parameter init (synthetic weights, no checkpoint load).
    w = jax.random.normal(kw, (h_emb, h_enc), dtype=jnp.float32) * (1.0 / jnp.sqrt(h_emb))
    b = jax.random.normal(kb, (h_enc,), dtype=jnp.float32) * 0.01

    out = iencoder_forward(x, w, b)
    out = jax.block_until_ready(out)

    # Correctness check against a plain-JAX reference matching the kernel's
    # numerics (bf16 inputs to the matmul, f32 accumulation, f32 bias add).
    x_bf = x.astype(jnp.bfloat16).astype(jnp.float32)
    w_bf = w.astype(jnp.bfloat16).astype(jnp.float32)
    ref = x_bf @ w_bf + b[None, :]

    assert out.shape == (n_nodes, h_enc)
    assert out.dtype == x.dtype
    assert jnp.allclose(out, ref, atol=1e-3, rtol=1e-3)
    # Sanity against the full-precision reference too (bf16 rounding only).
    assert jnp.allclose(out, x @ w + b[None, :], atol=5e-2, rtol=5e-2)

    # bf16-output variant (halves the dominant writeback stream downstream).
    out_bf16 = jax.block_until_ready(
        iencoder_forward(x, w, b, out_dtype=jnp.bfloat16))
    assert out_bf16.shape == (n_nodes, h_enc)
    assert out_bf16.dtype == jnp.bfloat16
    assert jnp.allclose(out_bf16.astype(jnp.float32), ref, atol=2e-2, rtol=2e-2)

    print("KERNEL_OK")
</pallas_src>

<mosaic_0001>
module attributes {stable_mosaic.version = 11 : i64} {
  func.func @_encode_kernel(%arg0: i32, %arg1: memref<16x32xf32, #tpu.memory_space<vmem>>, %arg2: memref<32x32xf32, #tpu.memory_space<vmem>>, %arg3: memref<1x32xf32, #tpu.memory_space<vmem>>, %arg4: memref<16x32xf32, #tpu.memory_space<vmem>>) attributes {dimension_semantics = [#tpu.dimension_semantics<parallel>], iteration_bounds = array<i64: 1>, scalar_prefetch = 0 : i64, scratch_operands = 0 : i64, tpu.core_type = #tpu.core_type<tc>, window_params = [{transform_indices = @transform_0, window_bounds = array<i64: 16, 32>}, {pipeline_mode = #tpu.pipeline_mode<synchronous>, transform_indices = @transform_1, window_bounds = array<i64: 32, 32>}, {pipeline_mode = #tpu.pipeline_mode<synchronous>, transform_indices = @transform_2, window_bounds = array<i64: 1, 32>}, {transform_indices = @transform_3, window_bounds = array<i64: 16, 32>}]} {
    %c0 = arith.constant 0 : index
    %c0_0 = arith.constant 0 : index
    %0 = vector.load %arg1[%c0, %c0_0] : memref<16x32xf32, #tpu.memory_space<vmem>>, vector<16x32xf32>
    %1 = arith.truncf %0 : vector<16x32xf32> to vector<16x32xbf16>
    %c0_1 = arith.constant 0 : index
    %c0_2 = arith.constant 0 : index
    %2 = vector.load %arg2[%c0_1, %c0_2] : memref<32x32xf32, #tpu.memory_space<vmem>>, vector<32x32xf32>
    %3 = arith.truncf %2 : vector<32x32xf32> to vector<32x32xbf16>
    %cst = arith.constant dense<0.000000e+00> : vector<16x32xf32>
    %4 = tpu.matmul %1, %3, %cst {dimension_numbers = #tpu.dot_dimension_numbers<[1], [0], [0], [1], [0, 0, 1, 1], [], []>} : vector<16x32xbf16>, vector<32x32xbf16>, vector<16x32xf32> -> vector<16x32xf32>
    %c0_3 = arith.constant 0 : index
    %c0_4 = arith.constant 0 : index
    %5 = vector.load %arg3[%c0_3, %c0_4] : memref<1x32xf32, #tpu.memory_space<vmem>>, vector<1x32xf32>
    %6 = vector.broadcast %5 : vector<1x32xf32> to vector<16x32xf32>
    %7 = arith.addf %4, %6 : vector<16x32xf32>
    %c0_5 = arith.constant 0 : index
    %c0_6 = arith.constant 0 : index
    %8 = vector.load %arg4[%c0_5, %c0_6] : memref<16x32xf32, #tpu.memory_space<vmem>>, vector<16x32xf32>
    tpu.vector_store %arg4[%c0_5, %c0_6], %7 {strides = array<i32>} : memref<16x32xf32, #tpu.memory_space<vmem>>, vector<16x32xf32>,
    return
  }
  func.func @transform_0(%arg0: i32) -> (i32, i32) {
    %c0_i32 = arith.constant 0 : i32
    %c0_i32_0 = arith.constant 0 : i32
    return %arg0, %c0_i32 : i32, i32
  }
  func.func @transform_1(%arg0: i32) -> (i32, i32) {
    %c0_i32 = arith.constant 0 : i32
    %c0_i32_0 = arith.constant 0 : i32
    %c0_i32_1 = arith.constant 0 : i32
    return %c0_i32, %c0_i32_0 : i32, i32
  }
  func.func @transform_2(%arg0: i32) -> (i32, i32) {
    %c0_i32 = arith.constant 0 : i32
    %c0_i32_0 = arith.constant 0 : i32
    %c0_i32_1 = arith.constant 0 : i32
    return %c0_i32, %c0_i32_0 : i32, i32
  }
  func.func @transform_3(%arg0: i32) -> (i32, i32) {
    %c0_i32 = arith.constant 0 : i32
    %c0_i32_0 = arith.constant 0 : i32
    return %arg0, %c0_i32 : i32, i32
  }
}

</mosaic_0001>

<llo_original>
// kernel: tpu_custom_call.1
$region0: #{tpu_custom_call.1}
  #allocation0 [shape = 'u32[]', space=smem, size = 0x4, offset = 0x4, fixed_abs, tag = 'smem constant byte address 0x4 - core index']
  #allocation1 [shape = 'u32[72,128]{1,0:T(1,128)}', space=vmem, size = 0x9000, scoped, tag = 'internal scratch']
  %s0 = inlined_call_operand.hbm [shape: f32[16,32], index: 0, kind: input, shape index: {}]
  %s1 = inlined_call_operand.hbm [shape: f32[32,32], index: 1, kind: input, shape index: {}]
  %s2 = inlined_call_operand.vmem [shape: f32[1,32], index: 2, kind: input, shape index: {}]
  %s3 = inlined_call_operand.hbm [shape: f32[16,32], index: 3, kind: output, shape index: {}]
  %s4 = sld [smem:[#allocation0]]
  $region30: #{tpu_custom_call.1} parent=0
    _
  %s6 = ssub.s32 1, %s4
  %s7 = scalar_select 0, %s6, %s4
  $region1: #{tpu_custom_call.1} parent=0
    #allocation2 [shape = 'u8[8192]{0}', space=vmem, size = 0x2000, scoped, tag = 'input window, operand 0, single buffered']
    #allocation3 [shape = 's32[1]{0}', space=sflag, size = 0x4, scoped, tag = 'scoped memory for tpu_custom_call.1']
    #allocation4 [shape = 's32[1]{0}', space=sflag, size = 0x4, scoped, tag = 'scoped memory for tpu_custom_call.1']
    #allocation5 [shape = 'u8[16384]{0}', space=vmem, size = 0x4000, scoped, tag = 'input window, operand 1, single buffered']
    #allocation6 [shape = 's32[1]{0}', space=sflag, size = 0x4, scoped, tag = 'scoped memory for tpu_custom_call.1']
    #allocation7 [shape = 'u8[8192]{0}', space=vmem, size = 0x2000, scoped, tag = 'output window, operand 0, single buffered']
    %8 = vsyncpa [#allocation3], 0
    %9 = vsyncpa [#allocation6], 0
    %10 = vsyncpa [#allocation4], 0
    // Predicated region
    $region2: #{tpu_custom_call.1} parent=1 // pred_check
      _
    $region3: #{tpu_custom_call.1} parent=1 // pred_check_branch
      %12 = sbr.rel (0) target = $region5
    $region4: #{tpu_custom_call.1} parent=1 // pred_region
      %14 = vsyncadd [#allocation3], 0
      %s15 = sshll.u32 %s0, 4
      %s16 = int_to_ptr.hbm [resolvable:$true] %s15
      %s17 = sshll.u32 [#allocation2], 4
      %s18 = int_to_ptr.vmem [resolvable:$true] %s17
      %23 = dma.hbm_to_vmem [thread:$0]  %s16, 256, %s18, [#allocation3], 128, 128, 8
    $region5: #{tpu_custom_call.1} parent=1 // pred_fallthru
      _
    // Predicated region
    $region6: #{tpu_custom_call.1} parent=1 // pred_check
      _
    $region7: #{tpu_custom_call.1} parent=1 // pred_check_branch
      %25 = sbr.rel (0) target = $region9
    $region8: #{tpu_custom_call.1} parent=1 // pred_region
      %27 = vsyncadd [#allocation6], 0
      %s28 = sshll.u32 %s1, 4
      %s29 = int_to_ptr.hbm [resolvable:$true] %s28
      %s30 = sshll.u32 [#allocation5], 4
      %s31 = int_to_ptr.vmem [resolvable:$true] %s30
      %36 = dma.hbm_to_vmem [thread:$0]  %s29, 512, %s31, [#allocation6], 128, 128, 8
    $region9: #{tpu_custom_call.1} parent=1 // pred_fallthru
      _
    // Predicated region
    $region10: #{tpu_custom_call.1} parent=1 // pred_check
      _
    $region11: #{tpu_custom_call.1} parent=1 // pred_check_branch
      %38 = sbr.rel (0) target = $region13
    $region12: #{tpu_custom_call.1} parent=1 // pred_region
      _
    $region13: #{tpu_custom_call.1} parent=1 // pred_fallthru
      _
    // Predicated region
    $region14: #{tpu_custom_call.1} parent=1 // pred_check
      _
    $region15: #{tpu_custom_call.1} parent=1 // pred_check_branch
      %40 = sbr.rel (0) target = $region17
    $region16: #{tpu_custom_call.1} parent=1 // pred_region
      %42 = dma.done [#allocation3], 256
    $region17: #{tpu_custom_call.1} parent=1 // pred_fallthru
      _
    // Predicated region
    $region18: #{tpu_custom_call.1} parent=1 // pred_check
      _
    $region19: #{tpu_custom_call.1} parent=1 // pred_check_branch
      %44 = sbr.rel (0) target = $region21
    $region20: #{tpu_custom_call.1} parent=1 // pred_region
      %46 = dma.done [#allocation6], 512
    $region21: #{tpu_custom_call.1} parent=1 // pred_fallthru
      _
    %v48 = vld [vmem:[#allocation2] sm:$0xff]
    %v49 = vld [vmem:[#allocation2 + $0x8] sm:$0xff]
    %v50 = vpack.c.bf16 %v49, %v48
    %v51 = vld [vmem:[#allocation5] sm:$0xff]
    %v52 = vld [vmem:[#allocation5 + $0x8] sm:$0xff]
    %v53 = vld [vmem:[#allocation5 + $0x10] sm:$0xff]
    %v54 = vld [vmem:[#allocation5 + $0x18] sm:$0xff]
    %v55 = vpack.c.bf16 %v52, %v51
    %v56 = vpack.c.bf16 %v54, %v53
    %v57 = vld [vmem:[%s2] sm:$0x1]
    %v59 = vperm.slane %v57, 0
    %vm61 = vcmask 261120
    %v63 = vsel %vm61, %v50, 0
    %65 = vmatpush.bf16.msra.mxu0 0
    %66 = vmatpush.bf16.msra.mxu0 0
    %67 = vmatpush.bf16.msra.mxu0 0
    %68 = vmatpush.bf16.msra.mxu0 0
    %69 = vmatpush.bf16.msra.mxu0 0
    %70 = vmatpush.bf16.msra.mxu0 0
    %71 = vmatpush.bf16.msra.mxu0 %v56
    %72 = vmatpush.bf16.msra.mxu0 %v55
    %73 = vmatmul.bf16.gmra.mxu0 %v63
    %v74 = vpop.f32.mrf.mxu0
    %v75 = vadd.f32 %v59, %v74
    %v76 = vpop.f32.mrf.mxu0
    %v77 = vadd.f32 %v59, %v76
    %78 = vdwg.mxu0
    %79 = vst.msk [vmem:[#allocation7] sm:$0xff] %vm61, %v75
    %80 = vst.msk [vmem:[#allocation7 + $0x8] sm:$0xff] %vm61, %v77
    // Predicated region
    $region22: #{tpu_custom_call.1} parent=1 // pred_check
      _
    $region23: #{tpu_custom_call.1} parent=1 // pred_check_branch
      %82 = sbr.rel (0) target = $region25
    $region24: #{tpu_custom_call.1} parent=1 // pred_region
      %84 = vsyncadd [#allocation4], 0
      %s85 = sshll.u32 [#allocation7], 4
      %s86 = int_to_ptr.vmem [resolvable:$true] %s85
      %s87 = sshll.u32 %s3, 4
      %s88 = int_to_ptr.hbm [resolvable:$true] %s87
      %93 = dma.vmem_to_hbm [thread:$0]  %s86, 256, %s88, [#allocation4], 128, 128, 8
    $region25: #{tpu_custom_call.1} parent=1 // pred_fallthru
      _
    // Predicated region
    $region26: #{tpu_custom_call.1} parent=1 // pred_check
      _
    $region27: #{tpu_custom_call.1} parent=1 // pred_check_branch
      %95 = sbr.rel (0) target = $region29
    $region28: #{tpu_custom_call.1} parent=1 // pred_region
      %97 = dma.done [#allocation4], 256
    $region29: #{tpu_custom_call.1} parent=1 // pred_fallthru
      _
    %98 = vsyncpa [#allocation3], 1
    %99 = vsyncpa [#allocation6], 1
    %100 = vsyncpa [#allocation4], 1

</llo_original>
